<compile_context>
chip_gen: v7x
topology: tpu7x:2x2x1
jax: 0.10.0
libtpu: 0.0.40
codegen_flags: <defaults>
</compile_context>

<pallas_src>
import jax
import jax.numpy as jnp
from jax.experimental import pallas as pl
from jax.experimental.pallas import tpu as pltpu

LANE = 128


def _round_up(x, m):
    return (x + m - 1) // m * m


def _fused_sage_kernel(x_ref, a_ref, w_ref, b_ref, o_ref, h_ref):
    """One grid step == one SAGEConv ('mean') layer; h persists in VMEM scratch.

    x_ref: [N, Fp]  f32   padded input features (read at layer 0 only)
    a_ref: [N, N]   bf16  row-normalized adjacency (resident across layers)
    w_ref: [2*Fp, Fp] bf16  this layer's merged [W_self; W_neigh]
    b_ref: [1, Fp]  f32   this layer's (padded) bias
    o_ref: [N, Fp]  f32   output (only the last layer's write matters)
    h_ref: [N, Fp]  f32   VMEM scratch carrying h across layers
    """
    layer = pl.program_id(0)
    is_last = layer == pl.num_programs(0) - 1

    @pl.when(layer == 0)
    def _():
        h_ref[...] = x_ref[...]

    h32 = h_ref[...]                                   # [N, Fp] f32
    h16 = h32.astype(jnp.bfloat16)

    # mean neighbor aggregation on the MXU: A_hat @ h   (bf16 in, f32 accumulate)
    neigh = jnp.dot(a_ref[...], h16, preferred_element_type=jnp.float32)

    # merged self + neighbor projection: [h | neigh] @ [W_self; W_neigh] + b
    hn = jnp.concatenate([h16, neigh.astype(jnp.bfloat16)], axis=-1)   # [N, 2*Fp]
    out = jnp.dot(hn, w_ref[...], preferred_element_type=jnp.float32) + b_ref[...]

    # relu on all but the last layer (kept in f32)
    out = jnp.where(is_last, out, jnp.maximum(out, 0.0))

    h_ref[...] = out                                   # carried to next layer
    o_ref[...] = out.astype(o_ref.dtype)               # last write wins


def graphsage_forward(a_hat_bf16, x_pad, w_stack, b_stack):
    """Full GraphSAGE forward (dropout p=0 == identity) as one fused pallas_call."""
    n_layers, two_fp, fp = w_stack.shape
    n = x_pad.shape[0]

    grid_spec = pltpu.PrefetchScalarGridSpec(
        num_scalar_prefetch=0,
        grid=(n_layers,),
        in_specs=[
            pl.BlockSpec((n, fp), lambda l: (0, 0)),               # padded features
            pl.BlockSpec((n, n), lambda l: (0, 0)),                # A_hat (DMA'd once)
            pl.BlockSpec((None, two_fp, fp), lambda l: (l, 0, 0)),  # per-layer W_cat
            pl.BlockSpec((None, 1, fp), lambda l: (l, 0, 0)),       # per-layer bias
        ],
        out_specs=pl.BlockSpec((n, fp), lambda l: (0, 0)),
        scratch_shapes=[pltpu.VMEM((n, fp), jnp.float32)],
    )

    return pl.pallas_call(
        _fused_sage_kernel,
        out_shape=jax.ShapeDtypeStruct((n, fp), jnp.float32),
        grid_spec=grid_spec,
        compiler_params=pltpu.CompilerParams(
            # layer axis is a sequential dependency (h carried in scratch)
            dimension_semantics=("arbitrary",),
        ),
    )(x_pad, a_hat_bf16, w_stack, b_stack)


def init_params(key, in_feats, n_hidden, n_classes, n_layers, fp):
    """Per-layer merged [W_self; W_neigh] (zero-padded to Fp lanes) + padded bias."""
    dims = [in_feats] + [n_hidden] * n_layers + [n_classes]
    w_list, b_list = [], []
    for i in range(len(dims) - 1):
        f_in, f_out = dims[i], dims[i + 1]
        key, k1, k2 = jax.random.split(key, 3)
        scale = 1.0 / jnp.sqrt(jnp.float32(f_in))
        w_self = jax.random.uniform(k1, (f_in, f_out), jnp.float32, -scale, scale)
        w_neigh = jax.random.uniform(k2, (f_in, f_out), jnp.float32, -scale, scale)
        w_self_p = jnp.zeros((fp, fp), jnp.float32).at[:f_in, :f_out].set(w_self)
        w_neigh_p = jnp.zeros((fp, fp), jnp.float32).at[:f_in, :f_out].set(w_neigh)
        w_list.append(jnp.concatenate([w_self_p, w_neigh_p], axis=0))   # [2*Fp, Fp]
        b_list.append(jnp.zeros((1, fp), jnp.float32))                  # padded bias
    w_stack = jnp.stack(w_list).astype(jnp.bfloat16)   # [L, 2*Fp, Fp] bf16 (MXU inputs)
    b_stack = jnp.stack(b_list)                        # [L, 1, Fp]    f32
    return w_stack, b_stack


def build_normalized_adjacency(key, n_nodes, edge_prob=0.1):
    """Dense random graph, row-normalized by in-degree ('mean' aggregator)."""
    adj = (jax.random.uniform(key, (n_nodes, n_nodes)) < edge_prob).astype(jnp.float32)
    adj = adj * (1.0 - jnp.eye(n_nodes, dtype=jnp.float32))  # no self loops
    deg = jnp.maximum(adj.sum(axis=1, keepdims=True), 1.0)
    return adj / deg


if __name__ == "__main__":
    # Small, deterministic problem.
    N = 128          # nodes
    IN_FEATS = 32
    N_HIDDEN = 64
    N_CLASSES = 16
    N_LAYERS = 2     # -> total SAGEConv layers = N_LAYERS + 1 = 3

    FP = _round_up(max(IN_FEATS, N_HIDDEN, N_CLASSES), LANE)   # 128 padded lanes

    key = jax.random.PRNGKey(0)
    k_graph, k_feat, k_params = jax.random.split(key, 3)

    a_hat = build_normalized_adjacency(k_graph, N).astype(jnp.bfloat16)
    x = jax.random.normal(k_feat, (N, IN_FEATS), jnp.float32)
    x_pad = jnp.zeros((N, FP), jnp.float32).at[:, :IN_FEATS].set(x)
    w_stack, b_stack = init_params(k_params, IN_FEATS, N_HIDDEN, N_CLASSES, N_LAYERS, FP)

    out_pad = graphsage_forward(a_hat, x_pad, w_stack, b_stack)
    out = out_pad[:, :N_CLASSES]                       # strip lane padding
    out = jax.block_until_ready(out)

    assert out.shape == (N, N_CLASSES), out.shape
    assert out.dtype == jnp.float32
    assert bool(jnp.all(jnp.isfinite(out)))
    print("KERNEL_OK")
</pallas_src>

<mosaic_0001>
module attributes {stable_mosaic.version = 11 : i64} {
  func.func @_fused_sage_kernel(%arg0: i32, %arg1: memref<128x128xf32, #tpu.memory_space<vmem>>, %arg2: memref<128x128xbf16, #tpu.memory_space<vmem>>, %arg3: memref<1x256x128xbf16, #tpu.memory_space<vmem>>, %arg4: memref<1x1x128xf32, #tpu.memory_space<vmem>>, %arg5: memref<128x128xf32, #tpu.memory_space<vmem>>, %arg6: memref<128x128xf32, #tpu.memory_space<vmem>>) attributes {dimension_semantics = [#tpu.dimension_semantics<arbitrary>], iteration_bounds = array<i64: 3>, scalar_prefetch = 0 : i64, scratch_operands = 1 : i64, tpu.core_type = #tpu.core_type<tc>, window_params = [{pipeline_mode = #tpu.pipeline_mode<synchronous>, transform_indices = @transform_0, window_bounds = array<i64: 128, 128>}, {pipeline_mode = #tpu.pipeline_mode<synchronous>, transform_indices = @transform_1, window_bounds = array<i64: 128, 128>}, {transform_indices = @transform_2, window_bounds = array<i64: 1, 256, 128>}, {transform_indices = @transform_3, window_bounds = array<i64: 1, 1, 128>}, {pipeline_mode = #tpu.pipeline_mode<synchronous>, transform_indices = @transform_4, window_bounds = array<i64: 128, 128>}]} {
    %c2_i32 = arith.constant 2 : i32
    %0 = arith.cmpi eq, %arg0, %c2_i32 : i32
    %c0_i32 = arith.constant 0 : i32
    %1 = arith.cmpi eq, %arg0, %c0_i32 : i32
    %2 = arith.extui %1 : i1 to i32
    %c0_i32_0 = arith.constant 0 : i32
    %3 = arith.cmpi ne, %2, %c0_i32_0 : i32
    scf.if %3 {
      %c0_16 = arith.constant 0 : index
      %c0_17 = arith.constant 0 : index
      %22 = vector.load %arg1[%c0_16, %c0_17] : memref<128x128xf32, #tpu.memory_space<vmem>>, vector<128x128xf32>
      %c0_18 = arith.constant 0 : index
      %c0_19 = arith.constant 0 : index
      %23 = vector.load %arg6[%c0_18, %c0_19] : memref<128x128xf32, #tpu.memory_space<vmem>>, vector<128x128xf32>
      tpu.vector_store %arg6[%c0_18, %c0_19], %22 {strides = array<i32>} : memref<128x128xf32, #tpu.memory_space<vmem>>, vector<128x128xf32>,
    } else {
    }
    %c0 = arith.constant 0 : index
    %c0_1 = arith.constant 0 : index
    %4 = vector.load %arg6[%c0, %c0_1] : memref<128x128xf32, #tpu.memory_space<vmem>>, vector<128x128xf32>
    %5 = arith.truncf %4 : vector<128x128xf32> to vector<128x128xbf16>
    %c0_2 = arith.constant 0 : index
    %c0_3 = arith.constant 0 : index
    %6 = vector.load %arg2[%c0_2, %c0_3] : memref<128x128xbf16, #tpu.memory_space<vmem>>, vector<128x128xbf16>
    %cst = arith.constant dense<0.000000e+00> : vector<128x128xf32>
    %7 = tpu.matmul %6, %5, %cst {dimension_numbers = #tpu.dot_dimension_numbers<[1], [0], [0], [1], [0, 0, 1, 1], [], []>} : vector<128x128xbf16>, vector<128x128xbf16>, vector<128x128xf32> -> vector<128x128xf32>
    %8 = arith.truncf %7 : vector<128x128xf32> to vector<128x128xbf16>
    %9 = tpu.concatenate %5, %8 in 1 : vector<128x128xbf16>, vector<128x128xbf16> -> vector<128x256xbf16>
    %c0_4 = arith.constant 0 : index
    %c0_5 = arith.constant 0 : index
    %c0_6 = arith.constant 0 : index
    %10 = vector.load %arg3[%c0_4, %c0_5, %c0_6] : memref<1x256x128xbf16, #tpu.memory_space<vmem>>, vector<1x256x128xbf16>
    %11 = vector.shape_cast %10 : vector<1x256x128xbf16> to vector<256x128xbf16>
    %cst_7 = arith.constant dense<0.000000e+00> : vector<128x128xf32>
    %12 = tpu.matmul %9, %11, %cst_7 {dimension_numbers = #tpu.dot_dimension_numbers<[1], [0], [0], [1], [0, 0, 1, 1], [], []>} : vector<128x256xbf16>, vector<256x128xbf16>, vector<128x128xf32> -> vector<128x128xf32>
    %c0_8 = arith.constant 0 : index
    %c0_9 = arith.constant 0 : index
    %c0_10 = arith.constant 0 : index
    %13 = vector.load %arg4[%c0_8, %c0_9, %c0_10] : memref<1x1x128xf32, #tpu.memory_space<vmem>>, vector<1x1x128xf32>
    %14 = vector.shape_cast %13 : vector<1x1x128xf32> to vector<1x128xf32>
    %15 = vector.broadcast %14 : vector<1x128xf32> to vector<128x128xf32>
    %16 = arith.addf %12, %15 : vector<128x128xf32>
    %cst_11 = arith.constant 0.000000e+00 : f32
    %17 = vector.broadcast %cst_11 : f32 to vector<128x128xf32>
    %18 = arith.maximumf %16, %17 : vector<128x128xf32>
    %19 = arith.select %0, %16, %18 : vector<128x128xf32>
    %c0_12 = arith.constant 0 : index
    %c0_13 = arith.constant 0 : index
    %20 = vector.load %arg6[%c0_12, %c0_13] : memref<128x128xf32, #tpu.memory_space<vmem>>, vector<128x128xf32>
    tpu.vector_store %arg6[%c0_12, %c0_13], %19 {strides = array<i32>} : memref<128x128xf32, #tpu.memory_space<vmem>>, vector<128x128xf32>,
    %c0_14 = arith.constant 0 : index
    %c0_15 = arith.constant 0 : index
    %21 = vector.load %arg5[%c0_14, %c0_15] : memref<128x128xf32, #tpu.memory_space<vmem>>, vector<128x128xf32>
    tpu.vector_store %arg5[%c0_14, %c0_15], %19 {strides = array<i32>} : memref<128x128xf32, #tpu.memory_space<vmem>>, vector<128x128xf32>,
    return
  }
  func.func @transform_0(%arg0: i32) -> (i32, i32) {
    %c0_i32 = arith.constant 0 : i32
    %c0_i32_0 = arith.constant 0 : i32
    %c0_i32_1 = arith.constant 0 : i32
    return %c0_i32, %c0_i32_0 : i32, i32
  }
  func.func @transform_1(%arg0: i32) -> (i32, i32) {
    %c0_i32 = arith.constant 0 : i32
    %c0_i32_0 = arith.constant 0 : i32
    %c0_i32_1 = arith.constant 0 : i32
    return %c0_i32, %c0_i32_0 : i32, i32
  }
  func.func @transform_2(%arg0: i32) -> (i32, i32, i32) {
    %c0_i32 = arith.constant 0 : i32
    %c0_i32_0 = arith.constant 0 : i32
    %c0_i32_1 = arith.constant 0 : i32
    return %arg0, %c0_i32, %c0_i32_0 : i32, i32, i32
  }
  func.func @transform_3(%arg0: i32) -> (i32, i32, i32) {
    %c0_i32 = arith.constant 0 : i32
    %c0_i32_0 = arith.constant 0 : i32
    %c0_i32_1 = arith.constant 0 : i32
    return %arg0, %c0_i32, %c0_i32_0 : i32, i32, i32
  }
  func.func @transform_4(%arg0: i32) -> (i32, i32) {
    %c0_i32 = arith.constant 0 : i32
    %c0_i32_0 = arith.constant 0 : i32
    %c0_i32_1 = arith.constant 0 : i32
    return %c0_i32, %c0_i32_0 : i32, i32
  }
}

</mosaic_0001>

<llo_original>
// kernel: tpu_custom_call.1
$region0: #{tpu_custom_call.1}
  #allocation0 [shape = 'u32[]', space=smem, size = 0x4, offset = 0x4, fixed_abs, tag = 'smem constant byte address 0x4 - core index']
  #allocation1 [shape = 'u32[144,128]{1,0:T(1,128)}', space=vmem, size = 0x12000, scoped, tag = 'internal scratch']
  #allocation2 [shape = 'f32[128,128]{1,0:T(8,128)}', space=vmem, size = 0x10000, scoped, tag = 'scratch operand']
  %s0 = inlined_call_operand.hbm [shape: f32[128,128], index: 0, kind: input, shape index: {}]
  %s1 = inlined_call_operand.hbm [shape: bf16[128,128], index: 1, kind: input, shape index: {}]
  %s2 = inlined_call_operand.hbm [shape: bf16[3,256,128], index: 2, kind: input, shape index: {}]
  %s3 = inlined_call_operand.vmem [shape: f32[3,1,128], index: 3, kind: input, shape index: {}]
  %s4 = inlined_call_operand.hbm [shape: f32[128,128], index: 4, kind: output, shape index: {}]
  %s5 = sld [smem:[#allocation0]]
  $region65: #{tpu_custom_call.1} parent=0
    _
  %s7 = ssub.s32 1, %s5
  %s8 = scalar_select 0, %s7, %s5
  $region1: #{tpu_custom_call.1} parent=0
    #allocation3 [shape = 'u8[65536]{0}', space=vmem, size = 0x10000, scoped, tag = 'input window, operand 0, single buffered']
    #allocation4 [shape = 's32[2]{0}', space=sflag, size = 0x8, scoped, tag = 'scoped memory for tpu_custom_call.1']
    #allocation5 [shape = 's32[2]{0}', space=sflag, size = 0x8, scoped, tag = 'scoped memory for tpu_custom_call.1']
    #allocation6 [shape = 'u8[32768]{0}', space=vmem, size = 0x8000, scoped, tag = 'input window, operand 1, single buffered']
    #allocation7 [shape = 's32[1]{0}', space=sflag, size = 0x4, scoped, tag = 'scoped memory for tpu_custom_call.1']
    #allocation8 [shape = 'u8[131072]{0}', space=vmem, size = 0x20000, scoped, tag = 'input window, operand 2']
    #allocation9 [shape = 'u8[65536]{0}', space=vmem, size = 0x10000, scoped, tag = 'output window, operand 0, single buffered']
    %9 = vsyncpa [#allocation4], 0
    %10 = vsyncpa [#allocation7], 0
    %11 = vsyncpa [#allocation5], 0
    loop: start=0, step=1, limit=5
    $region2: #{tpu_custom_call.1} parent=1 // loop_pre_header
      _
    $region3: #{tpu_custom_call.1} parent=1 // loop_header
      %s13 = sphi 0, %s17
      %p14 = scmp.ge.s32.totalorder %s13, 5
      %s21 = sphi 0, %s21
      %s23 = sphi 0, %s21
      %s24 = sphi 0, %s23
      %s38 = sphi 0, %s24
      %s42 = sphi 0, %s42
      %s44 = sphi 0, %s42
      %s45 = sphi 0, %s44
      %s59 = sphi 0, %s45
      %s65 = sphi 0, %s67
      %s68 = sphi 0, %s65
      %s69 = sphi 0, %s68
      %s85 = sphi 0, %s69
      %s91 = sphi 0, %s93
      %s94 = sphi 0, %s91
      %s95 = sphi 0, %s94
      %s111 = sphi 0, %s95
      %s115 = sphi 0, %s115
      %s117 = sphi 0, %s115
      %s118 = sphi 0, %s117
      %s132 = sphi 0, %s118
    $region4: #{tpu_custom_call.1} parent=1 // loop_header_branch
      %16 = sbr.rel (%p14) target = $region8
    $region5: #{tpu_custom_call.1} parent=1 // loop_body
      %s18 = ssub.s32 %s13, 1
      %s19 = ssub.s32 %s13, 2
      %s20 = sadd.s32 %s13, 1
      %s22 = sadd.s32 %s21, 1
      %p25 = scmp.eq.s32.totalorder %s13, 2
      %p26 = scmp.ne.s32.totalorder %s21, %s23
      %p27 = scmp.eq.s32.totalorder %s13, 0
      %p28 = por %p26, %p27
      %p29 = scmp.ne.s32.totalorder %s21, %s23
      %p30 = scmp.eq.s32.totalorder %s18, 2
      %p31 = por %p29, %p30
      %p32 = scmp.ne.s32.totalorder %s23, %s24
      %p33 = scmp.eq.s32.totalorder %s18, 0
      %p34 = por %p32, %p33
      %p35 = scmp.ne.s32.totalorder %s23, %s24
      %p36 = scmp.eq.s32.totalorder %s19, 2
      %p37 = por %p35, %p36
      %p39 = scmp.ne.s32.totalorder %s24, %s38
      %p40 = scmp.eq.s32.totalorder %s19, 0
      %p41 = por %p39, %p40
      %s43 = sadd.s32 %s42, 1
      %p46 = scmp.eq.s32.totalorder %s13, 2
      %p47 = scmp.ne.s32.totalorder %s42, %s44
      %p48 = scmp.eq.s32.totalorder %s13, 0
      %p49 = por %p47, %p48
      %p50 = scmp.ne.s32.totalorder %s42, %s44
      %p51 = scmp.eq.s32.totalorder %s18, 2
      %p52 = por %p50, %p51
      %p53 = scmp.ne.s32.totalorder %s44, %s45
      %p54 = scmp.eq.s32.totalorder %s18, 0
      %p55 = por %p53, %p54
      %p56 = scmp.ne.s32.totalorder %s44, %s45
      %p57 = scmp.eq.s32.totalorder %s19, 2
      %p58 = por %p56, %p57
      %p60 = scmp.ne.s32.totalorder %s45, %s59
      %p61 = scmp.eq.s32.totalorder %s19, 0
      %p62 = por %p60, %p61
      %s63 = ssub.s32 %s13, %s20
      %p64 = scmp.eq.s32.totalorder %s63, 0
      %s66 = sadd.s32 %s65, 1
      %s67 = scalar_select %p64, %s65, %s66
      %p70 = pneg %p64
      %p71 = scmp.eq.s32.totalorder %s13, 2
      %p72 = por %p70, %p71
      %p73 = scmp.ne.s32.totalorder %s65, %s68
      %p74 = scmp.eq.s32.totalorder %s13, 0
      %p75 = por %p73, %p74
      %p76 = scmp.ne.s32.totalorder %s65, %s68
      %p77 = scmp.eq.s32.totalorder %s18, 2
      %p78 = por %p76, %p77
      %p79 = scmp.ne.s32.totalorder %s68, %s69
      %p80 = scmp.eq.s32.totalorder %s18, 0
      %p81 = por %p79, %p80
      %p82 = scmp.ne.s32.totalorder %s68, %s69
      %p83 = scmp.eq.s32.totalorder %s19, 2
      %p84 = por %p82, %p83
      %p86 = scmp.ne.s32.totalorder %s69, %s85
      %p87 = scmp.eq.s32.totalorder %s19, 0
      %p88 = por %p86, %p87
      %s89 = ssub.s32 %s13, %s20
      %p90 = scmp.eq.s32.totalorder %s89, 0
      %s92 = sadd.s32 %s91, 1
      %s93 = scalar_select %p90, %s91, %s92
      %p96 = pneg %p90
      %p97 = scmp.eq.s32.totalorder %s13, 2
      %p98 = por %p96, %p97
      %p99 = scmp.ne.s32.totalorder %s91, %s94
      %p100 = scmp.eq.s32.totalorder %s13, 0
      %p101 = por %p99, %p100
      %p102 = scmp.ne.s32.totalorder %s91, %s94
      %p103 = scmp.eq.s32.totalorder %s18, 2
      %p104 = por %p102, %p103
      %p105 = scmp.ne.s32.totalorder %s94, %s95
      %p106 = scmp.eq.s32.totalorder %s18, 0
      %p107 = por %p105, %p106
      %p108 = scmp.ne.s32.totalorder %s94, %s95
      %p109 = scmp.eq.s32.totalorder %s19, 2
      %p110 = por %p108, %p109
      %p112 = scmp.ne.s32.totalorder %s95, %s111
      %p113 = scmp.eq.s32.totalorder %s19, 0
      %p114 = por %p112, %p113
      %s116 = sadd.s32 %s115, 1
      %p119 = scmp.eq.s32.totalorder %s13, 2
      %p120 = scmp.ne.s32.totalorder %s115, %s117
      %p121 = scmp.eq.s32.totalorder %s13, 0
      %p122 = por %p120, %p121
      %p123 = scmp.ne.s32.totalorder %s115, %s117
      %p124 = scmp.eq.s32.totalorder %s18, 2
      %p125 = por %p123, %p124
      %p126 = scmp.ne.s32.totalorder %s117, %s118
      %p127 = scmp.eq.s32.totalorder %s18, 0
      %p128 = por %p126, %p127
      %p129 = scmp.ne.s32.totalorder %s117, %s118
      %p130 = scmp.eq.s32.totalorder %s19, 2
      %p131 = por %p129, %p130
      %p133 = scmp.ne.s32.totalorder %s118, %s132
      %p134 = scmp.eq.s32.totalorder %s19, 0
      %p135 = por %p133, %p134
      %p136 = scmp.le.s32.totalorder 1, %s13
      %p137 = scmp.lt.s32.totalorder %s13, 4
      %p138 = pnand %p136, %p137
      %p139 = pneg %p138
      // Predicated region
      $region9: #{tpu_custom_call.1} parent=5 // pred_check
        _
      $region10: #{tpu_custom_call.1} parent=5 // pred_check_branch
        %141 = sbr.rel (%p138) target = $region12
      $region11: #{tpu_custom_call.1} parent=5 // pred_region
        %s142 = ssub.s32 %s13, 1
        // Predicated region
        $region13: #{tpu_custom_call.1} parent=11 // pred_check
          %p143 = pneg %p34
        $region14: #{tpu_custom_call.1} parent=11 // pred_check_branch
          %145 = sbr.rel (%p143) target = $region16
        $region15: #{tpu_custom_call.1} parent=11 // pred_region
          %s147 = ssub.s32 2048, 2048
          %148 = vsyncadd [#allocation4], %s147
          %s149 = sshll.u32 [#allocation3], 4
          %s150 = int_to_ptr.vmem [resolvable:$true] %s149
          %155 = dma.hbm_to_vmem [thread:$0]  %s0, 2048, %s150, [#allocation4], 128, 128, 8
        $region16: #{tpu_custom_call.1} parent=11 // pred_fallthru
          _
        // Predicated region
        $region17: #{tpu_custom_call.1} parent=11 // pred_check
          %p156 = pneg %p55
        $region18: #{tpu_custom_call.1} parent=11 // pred_check_branch
          %158 = sbr.rel (%p156) target = $region20
        $region19: #{tpu_custom_call.1} parent=11 // pred_region
          %s160 = ssub.s32 1024, 1024
          %161 = vsyncadd [#allocation7], %s160
          %s162 = sshll.u32 [#allocation6], 4
          %s163 = int_to_ptr.vmem [resolvable:$true] %s162
          %168 = dma.hbm_to_vmem [thread:$0]  %s1, 1024, %s163, [#allocation7], 64, 64, 4
        $region20: #{tpu_custom_call.1} parent=11 // pred_fallthru
          _
      $region12: #{tpu_custom_call.1} parent=5 // pred_fallthru
        _
      %p169 = scmp.lt.s32.totalorder %s13, 3
      // Predicated region
      $region21: #{tpu_custom_call.1} parent=5 // pred_check
        %p170 = pneg %p169
      $region22: #{tpu_custom_call.1} parent=5 // pred_check_branch
        %172 = sbr.rel (%p170) target = $region24
      $region23: #{tpu_custom_call.1} parent=5 // pred_region
        // Predicated region
        $region25: #{tpu_custom_call.1} parent=23 // pred_check
          %p173 = pneg %p75
        $region26: #{tpu_custom_call.1} parent=23 // pred_check_branch
          %175 = sbr.rel (%p173) target = $region28
        $region27: #{tpu_custom_call.1} parent=23 // pred_region
          %s176 = sand.u32 %s13, 1
          %s177 = scalar_lea.sflag [#allocation4], %s176
          %s178 = sand.u32 %s65, 1
          %s179 = smul.addr %s178, 128
          %s180 = scalar_lea.vmem [#allocation8], %s179
          %s182 = ssub.s32 2048, 2048
          %183 = vsyncadd %s177, %s182
          %s184 = smul.addr %s13, 32
          %s185 = smul.addr %s184, 64
          %s186 = scalar_lea.hbm %s2, %s185
          %s187 = sshll.u32 %s180, 4
          %s188 = int_to_ptr.vmem [resolvable:$true] %s187
          %193 = dma.hbm_to_vmem [thread:$0]  %s186, 2048, %s188, %s177, 64, 64, 4
        $region28: #{tpu_custom_call.1} parent=23 // pred_fallthru
          _
        // Predicated region
        $region29: #{tpu_custom_call.1} parent=23 // pred_check
          %p194 = pneg %p101
        $region30: #{tpu_custom_call.1} parent=23 // pred_check_branch
          %196 = sbr.rel (%p194) target = $region32
        $region31: #{tpu_custom_call.1} parent=23 // pred_region
          %p197 = scmp.lt.s32.totalorder %s13, 2
          %s198 = scalar_select %p197, %s13, 2
          %s199 = scalar_lea.vmem %s3, %s198
        $region32: #{tpu_custom_call.1} parent=23 // pred_fallthru
          _
      $region24: #{tpu_custom_call.1} parent=5 // pred_fallthru
        _
      %p200 = scmp.le.s32.totalorder 1, %s13
      %p201 = scmp.lt.s32.totalorder %s13, 4
      %p202 = pnand %p200, %p201
      %p203 = pneg %p202
      // Predicated region
      $region33: #{tpu_custom_call.1} parent=5 // pred_check
        _
      $region34: #{tpu_custom_call.1} parent=5 // pred_check_branch
        %205 = sbr.rel (%p202) target = $region36
      $region35: #{tpu_custom_call.1} parent=5 // pred_region
        %s206 = ssub.s32 %s13, 1
        // Predicated region
        $region37: #{tpu_custom_call.1} parent=35 // pred_check
          %p207 = pneg %p34
        $region38: #{tpu_custom_call.1} parent=35 // pred_check_branch
          %209 = sbr.rel (%p207) target = $region40
        $region39: #{tpu_custom_call.1} parent=35 // pred_region
          %210 = dma.done [#allocation4], 2048
        $region40: #{tpu_custom_call.1} parent=35 // pred_fallthru
          _
        // Predicated region
        $region41: #{tpu_custom_call.1} parent=35 // pred_check
          %p211 = pneg %p55
        $region42: #{tpu_custom_call.1} parent=35 // pred_check_branch
          %213 = sbr.rel (%p211) target = $region44
        $region43: #{tpu_custom_call.1} parent=35 // pred_region
          %214 = dma.done [#allocation7], 1024
        $region44: #{tpu_custom_call.1} parent=35 // pred_fallthru
          _
        %s215 = sand.u32 %s18, 1
        %s216 = scalar_lea.sflag [#allocation4], %s215
        %s217 = sand.u32 %s68, 1
        %s218 = smul.addr %s217, 128
        %s219 = scalar_lea.vmem [#allocation8], %s218
        // Predicated region
        $region45: #{tpu_custom_call.1} parent=35 // pred_check
          %p220 = pneg %p81
        $region46: #{tpu_custom_call.1} parent=35 // pred_check_branch
          %222 = sbr.rel (%p220) target = $region48
        $region47: #{tpu_custom_call.1} parent=35 // pred_region
          %223 = dma.done %s216, 2048
        $region48: #{tpu_custom_call.1} parent=35 // pred_fallthru
          _
        %p224 = pneg %p34
        %p225 = pneg %p31
        %p226 = pneg %p55
        %p227 = pneg %p52
        %s228 = sand.u32 %s18, 1
        %s229 = scalar_lea.sflag [#allocation4], %s228
        %s230 = sand.u32 %s68, 1
        %s231 = smul.addr %s230, 128
        %s232 = scalar_lea.vmem [#allocation8], %s231
        %p233 = pneg %p81
        %p234 = pneg %p78
        %p235 = scmp.lt.s32.totalorder %s18, 2
        %s236 = scalar_select %p235, %s18, 2
        %s237 = scalar_lea.vmem %s3, %s236
        %p238 = pneg %p107
        %p239 = pneg %p104
        %p240 = pneg %p128
        %p241 = pneg %p125
        %p242 = scmp.lt.s32.totalorder %s18, 2
        %s243 = scalar_select %p242, %s18, 2
        %s244 = scalar_lea.vmem %s3, %s243
        %p246 = scmp.eq.s32.totalorder %s18, 2
        %p247 = scmp.eq.s32.totalorder %s18, 0
        // Predicated region
        $region49: #{tpu_custom_call.1} parent=35 // pred_check
          %p248 = pneg %p247
        $region50: #{tpu_custom_call.1} parent=35 // pred_check_branch
          %250 = sbr.rel (%p248) target = $region52
        $region51: #{tpu_custom_call.1} parent=35 // pred_region
          %v251 = vld [vmem:[#allocation3] sm:$0xff]
          %v252 = vld [vmem:[#allocation3 + $0x8] sm:$0xff]
          %v253 = vld [vmem:[#allocation3 + $0x10] sm:$0xff]
          %v254 = vld [vmem:[#allocation3 + $0x18] sm:$0xff]
          %v255 = vld [vmem:[#allocation3 + $0x20] sm:$0xff]
          %v256 = vld [vmem:[#allocation3 + $0x28] sm:$0xff]
          %v257 = vld [vmem:[#allocation3 + $0x30] sm:$0xff]
          %v258 = vld [vmem:[#allocation3 + $0x38] sm:$0xff]
          %v259 = vld [vmem:[#allocation3 + $0x40] sm:$0xff]
          %v260 = vld [vmem:[#allocation3 + $0x48] sm:$0xff]
          %v261 = vld [vmem:[#allocation3 + $0x50] sm:$0xff]
          %v262 = vld [vmem:[#allocation3 + $0x58] sm:$0xff]
          %v263 = vld [vmem:[#allocation3 + $0x60] sm:$0xff]
          %v264 = vld [vmem:[#allocation3 + $0x68] sm:$0xff]
          %v265 = vld [vmem:[#allocation3 + $0x70] sm:$0xff]
          %v266 = vld [vmem:[#allocation3 + $0x78] sm:$0xff]
          %267 = vst [vmem:[#allocation2] sm:$0xff] %v251
          %268 = vst [vmem:[#allocation2 + $0x8] sm:$0xff] %v252
          %269 = vst [vmem:[#allocation2 + $0x10] sm:$0xff] %v253
          %270 = vst [vmem:[#allocation2 + $0x18] sm:$0xff] %v254
          %271 = vst [vmem:[#allocation2 + $0x20] sm:$0xff] %v255
          %272 = vst [vmem:[#allocation2 + $0x28] sm:$0xff] %v256
          %273 = vst [vmem:[#allocation2 + $0x30] sm:$0xff] %v257
          %274 = vst [vmem:[#allocation2 + $0x38] sm:$0xff] %v258
          %275 = vst [vmem:[#allocation2 + $0x40] sm:$0xff] %v259
          %276 = vst [vmem:[#allocation2 + $0x48] sm:$0xff] %v260
          %277 = vst [vmem:[#allocation2 + $0x50] sm:$0xff] %v261
          %278 = vst [vmem:[#allocation2 + $0x58] sm:$0xff] %v262
          %279 = vst [vmem:[#allocation2 + $0x60] sm:$0xff] %v263
          %280 = vst [vmem:[#allocation2 + $0x68] sm:$0xff] %v264
          %281 = vst [vmem:[#allocation2 + $0x70] sm:$0xff] %v265
          %282 = vst [vmem:[#allocation2 + $0x78] sm:$0xff] %v266
        $region52: #{tpu_custom_call.1} parent=35 // pred_fallthru
          _
        %v283 = vld [vmem:[#allocation2] sm:$0xff]
        %v284 = vld [vmem:[#allocation2 + $0x8] sm:$0xff]
        %v285 = vld [vmem:[#allocation2 + $0x10] sm:$0xff]
        %v286 = vld [vmem:[#allocation2 + $0x18] sm:$0xff]
        %v287 = vld [vmem:[#allocation2 + $0x20] sm:$0xff]
        %v288 = vld [vmem:[#allocation2 + $0x28] sm:$0xff]
        %v289 = vld [vmem:[#allocation2 + $0x30] sm:$0xff]
        %v290 = vld [vmem:[#allocation2 + $0x38] sm:$0xff]
        %v291 = vld [vmem:[#allocation2 + $0x40] sm:$0xff]
        %v292 = vld [vmem:[#allocation2 + $0x48] sm:$0xff]
        %v293 = vld [vmem:[#allocation2 + $0x50] sm:$0xff]
        %v294 = vld [vmem:[#allocation2 + $0x58] sm:$0xff]
        %v295 = vld [vmem:[#allocation2 + $0x60] sm:$0xff]
        %v296 = vld [vmem:[#allocation2 + $0x68] sm:$0xff]
        %v297 = vld [vmem:[#allocation2 + $0x70] sm:$0xff]
        %v298 = vld [vmem:[#allocation2 + $0x78] sm:$0xff]
        %v299 = vpack.c.bf16 %v284, %v283
        %v300 = vpack.c.bf16 %v286, %v285
        %v301 = vpack.c.bf16 %v288, %v287
        %v302 = vpack.c.bf16 %v290, %v289
        %v303 = vpack.c.bf16 %v292, %v291
        %v304 = vpack.c.bf16 %v294, %v293
        %v305 = vpack.c.bf16 %v296, %v295
        %v306 = vpack.c.bf16 %v298, %v297
        %v307 = vld [vmem:[#allocation6] sm:$0xf]
        %v308 = vld [vmem:[#allocation6 + $0x4] sm:$0xf]
        %v309 = vld [vmem:[#allocation6 + $0x8] sm:$0xf]
        %v310 = vld [vmem:[#allocation6 + $0xc] sm:$0xf]
        %v311 = vld [vmem:[#allocation6 + $0x10] sm:$0xf]
        %v312 = vld [vmem:[#allocation6 + $0x14] sm:$0xf]
        %v313 = vld [vmem:[#allocation6 + $0x18] sm:$0xf]
        %v314 = vld [vmem:[#allocation6 + $0x1c] sm:$0xf]
        %v315 = vld [vmem:[#allocation6 + $0x20] sm:$0xf]
        %v316 = vld [vmem:[#allocation6 + $0x24] sm:$0xf]
        %v317 = vld [vmem:[#allocation6 + $0x28] sm:$0xf]
        %v318 = vld [vmem:[#allocation6 + $0x2c] sm:$0xf]
        %v319 = vld [vmem:[#allocation6 + $0x30] sm:$0xf]
        %v320 = vld [vmem:[#allocation6 + $0x34] sm:$0xf]
        %v321 = vld [vmem:[#allocation6 + $0x38] sm:$0xf]
        %v322 = vld [vmem:[#allocation6 + $0x3c] sm:$0xf]
        %v339 = vunpack.c.l.b16 %v307
        %v340 = vunpack.c.l.b16 %v308
        %v341 = vunpack.c.l.b16 %v309
        %v342 = vunpack.c.l.b16 %v310
        %v343 = vunpack.c.l.b16 %v311
        %v344 = vunpack.c.l.b16 %v312
        %v345 = vunpack.c.l.b16 %v313
        %v346 = vunpack.c.l.b16 %v314
        %v347 = vunpack.c.l.b16 %v315
        %v348 = vunpack.c.l.b16 %v316
        %v349 = vunpack.c.l.b16 %v317
        %v350 = vunpack.c.l.b16 %v318
        %v351 = vunpack.c.l.b16 %v319
        %v352 = vunpack.c.l.b16 %v320
        %v353 = vunpack.c.l.b16 %v321
        %v354 = vunpack.c.l.b16 %v322
        %v355 = vpack.c.b16 %v340, %v339
        %v356 = vpack.c.b16 %v342, %v341
        %v357 = vpack.c.b16 %v344, %v343
        %v358 = vpack.c.b16 %v346, %v345
        %v359 = vpack.c.b16 %v348, %v347
        %v360 = vpack.c.b16 %v350, %v349
        %v361 = vpack.c.b16 %v352, %v351
        %v362 = vpack.c.b16 %v354, %v353
        %371 = vmatprep.subr.bf16.mxu0 0
        %372 = vmatpush1.bf16.msra.mxu0 %v299
        %373 = vmatprep.subr.bf16.mxu0 0
        %374 = vmatpush1.bf16.msra.mxu0 %v300
        %375 = vmatprep.subr.bf16.mxu0 0
        %376 = vmatpush1.bf16.msra.mxu0 %v301
        %377 = vmatprep.subr.bf16.mxu0 0
        %378 = vmatpush1.bf16.msra.mxu0 %v302
        %379 = vmatprep.subr.bf16.mxu0 0
        %380 = vmatpush1.bf16.msra.mxu0 %v303
        %381 = vmatprep.subr.bf16.mxu0 0
        %382 = vmatpush1.bf16.msra.mxu0 %v304
        %383 = vmatprep.subr.bf16.mxu0 0
        %384 = vmatpush1.bf16.msra.mxu0 %v305
        %385 = vmatprep.subr.bf16.mxu0 0
        %386 = vmatpush1.bf16.msra.mxu0 %v306
        %387 = vmatprep.subr.bf16.mxu0 0
        %388 = vmatpush1.bf16.msra.mxu0 0
        %389 = vmatprep.subr.bf16.mxu0 0
        %390 = vmatpush1.bf16.msra.mxu0 0
        %391 = vmatprep.subr.bf16.mxu0 0
        %392 = vmatpush1.bf16.msra.mxu0 0
        %393 = vmatprep.subr.bf16.mxu0 0
        %394 = vmatpush1.bf16.msra.mxu0 0
        %395 = vmatprep.subr.bf16.mxu0 0
        %396 = vmatpush1.bf16.msra.mxu0 0
        %397 = vmatprep.subr.bf16.mxu0 0
        %398 = vmatpush1.bf16.msra.mxu0 0
        %399 = vmatprep.subr.bf16.mxu0 0
        %400 = vmatpush1.bf16.msra.mxu0 0
        %401 = vmatprep.subr.bf16.mxu0 0
        %402 = vmatpush1.bf16.msra.mxu0 0
        %403 = vmatprep.mubr.bf16.mxu0 0
        %404 = vmatmul.mubr.bf16.gmra.mrb[0].mxu0 %v355
        %v405 = vpop.f32.mrb[0].mxu0
        %v406 = vadd.f32 0.0, %v405
        %v407 = vpop.f32.mrb[0].mxu0
        %v408 = vpop.f32.mrb[0].mxu0
        %v409 = vadd.f32 0.0, %v408
        %v410 = vpop.f32.mrb[0].mxu0
        %411 = vmatprep.mubr.bf16.mxu0 0
        %412 = vmatmul.mubr.bf16.gmra.mrb[0].mxu0 %v356
        %v413 = vpop.f32.mrb[0].mxu0
        %v414 = vadd.f32 0.0, %v413
        %v415 = vpop.f32.mrb[0].mxu0
        %v416 = vpop.f32.mrb[0].mxu0
        %v417 = vadd.f32 0.0, %v416
        %v418 = vpop.f32.mrb[0].mxu0
        %419 = vmatprep.mubr.bf16.mxu0 0
        %420 = vmatmul.mubr.bf16.gmra.mrb[0].mxu0 %v357
        %v421 = vpop.f32.mrb[0].mxu0
        %v422 = vadd.f32 0.0, %v421
        %v423 = vpop.f32.mrb[0].mxu0
        %v424 = vpop.f32.mrb[0].mxu0
        %v425 = vadd.f32 0.0, %v424
        %v426 = vpop.f32.mrb[0].mxu0
        %427 = vmatprep.mubr.bf16.mxu0 0
        %428 = vmatmul.mubr.bf16.gmra.mrb[0].mxu0 %v358
        %v429 = vpop.f32.mrb[0].mxu0
        %v430 = vadd.f32 0.0, %v429
        %v431 = vpop.f32.mrb[0].mxu0
        %v432 = vpop.f32.mrb[0].mxu0
        %v433 = vadd.f32 0.0, %v432
        %v434 = vpop.f32.mrb[0].mxu0
        %435 = vmatprep.mubr.bf16.mxu0 0
        %436 = vmatmul.mubr.bf16.gmra.mrb[0].mxu0 %v359
        %v437 = vpop.f32.mrb[0].mxu0
        %v438 = vadd.f32 0.0, %v437
        %v439 = vpop.f32.mrb[0].mxu0
        %v440 = vpop.f32.mrb[0].mxu0
        %v441 = vadd.f32 0.0, %v440
        %v442 = vpop.f32.mrb[0].mxu0
        %443 = vmatprep.mubr.bf16.mxu0 0
        %444 = vmatmul.mubr.bf16.gmra.mrb[0].mxu0 %v360
        %v445 = vpop.f32.mrb[0].mxu0
        %v446 = vadd.f32 0.0, %v445
        %v447 = vpop.f32.mrb[0].mxu0
        %v448 = vpop.f32.mrb[0].mxu0
        %v449 = vadd.f32 0.0, %v448
        %v450 = vpop.f32.mrb[0].mxu0
        %451 = vmatprep.mubr.bf16.mxu0 0
        %452 = vmatmul.mubr.bf16.gmra.mrb[0].mxu0 %v361
        %v453 = vpop.f32.mrb[0].mxu0
        %v454 = vadd.f32 0.0, %v453
        %v455 = vpop.f32.mrb[0].mxu0
        %v456 = vpop.f32.mrb[0].mxu0
        %v457 = vadd.f32 0.0, %v456
        %v458 = vpop.f32.mrb[0].mxu0
        %459 = vmatprep.mubr.bf16.mxu0 0
        %460 = vmatmul.mubr.bf16.gmra.mrb[0].mxu0 %v362
        %v461 = vpop.f32.mrb[0].mxu0
        %v462 = vadd.f32 0.0, %v461
        %v463 = vpop.f32.mrb[0].mxu0
        %v464 = vpop.f32.mrb[0].mxu0
        %v465 = vadd.f32 0.0, %v464
        %v466 = vpop.f32.mrb[0].mxu0
        %467 = vdwg.mxu0
        %v468 = vpack.c.bf16 %v409, %v406
        %v469 = vpack.c.bf16 %v417, %v414
        %v470 = vpack.c.bf16 %v425, %v422
        %v471 = vpack.c.bf16 %v433, %v430
        %v472 = vpack.c.bf16 %v441, %v438
        %v473 = vpack.c.bf16 %v449, %v446
        %v474 = vpack.c.bf16 %v457, %v454
        %v475 = vpack.c.bf16 %v465, %v462
        %v476 = vld [vmem:[%s219] sm:$0xf]
        %v477 = vld [vmem:[%s219 + $0x4] sm:$0xf]
        %v478 = vld [vmem:[%s219 + $0x8] sm:$0xf]
        %v479 = vld [vmem:[%s219 + $0xc] sm:$0xf]
        %v480 = vld [vmem:[%s219 + $0x10] sm:$0xf]
        %v481 = vld [vmem:[%s219 + $0x14] sm:$0xf]
        %v482 = vld [vmem:[%s219 + $0x18] sm:$0xf]
        %v483 = vld [vmem:[%s219 + $0x1c] sm:$0xf]
        %v484 = vld [vmem:[%s219 + $0x20] sm:$0xf]
        %v485 = vld [vmem:[%s219 + $0x24] sm:$0xf]
        %v486 = vld [vmem:[%s219 + $0x28] sm:$0xf]
        %v487 = vld [vmem:[%s219 + $0x2c] sm:$0xf]
        %v488 = vld [vmem:[%s219 + $0x30] sm:$0xf]
        %v489 = vld [vmem:[%s219 + $0x34] sm:$0xf]
        %v490 = vld [vmem:[%s219 + $0x38] sm:$0xf]
        %v491 = vld [vmem:[%s219 + $0x3c] sm:$0xf]
        %v492 = vld [vmem:[%s219 + $0x40] sm:$0xf]
        %v493 = vld [vmem:[%s219 + $0x44] sm:$0xf]
        %v494 = vld [vmem:[%s219 + $0x48] sm:$0xf]
        %v495 = vld [vmem:[%s219 + $0x4c] sm:$0xf]
        %v496 = vld [vmem:[%s219 + $0x50] sm:$0xf]
        %v497 = vld [vmem:[%s219 + $0x54] sm:$0xf]
        %v498 = vld [vmem:[%s219 + $0x58] sm:$0xf]
        %v499 = vld [vmem:[%s219 + $0x5c] sm:$0xf]
        %v500 = vld [vmem:[%s219 + $0x60] sm:$0xf]
        %v501 = vld [vmem:[%s219 + $0x64] sm:$0xf]
        %v502 = vld [vmem:[%s219 + $0x68] sm:$0xf]
        %v503 = vld [vmem:[%s219 + $0x6c] sm:$0xf]
        %v504 = vld [vmem:[%s219 + $0x70] sm:$0xf]
        %v505 = vld [vmem:[%s219 + $0x74] sm:$0xf]
        %v506 = vld [vmem:[%s219 + $0x78] sm:$0xf]
        %v507 = vld [vmem:[%s219 + $0x7c] sm:$0xf]
        %v508 = vld [vmem:[%s244] sm:$0x1]
        %v510 = vlaneseq
        %v511 = vshrl.u32 %v510, 7
        %v512 = vsub.s32 0, %v511
        %v513 = vrot.slane %v508, %v512
        %v547 = vunpack.c.l.b16 %v476
        %v548 = vunpack.c.l.b16 %v477
        %v549 = vunpack.c.l.b16 %v478
        %v550 = vunpack.c.l.b16 %v479
        %v551 = vunpack.c.l.b16 %v480
        %v552 = vunpack.c.l.b16 %v481
        %v553 = vunpack.c.l.b16 %v482
        %v554 = vunpack.c.l.b16 %v483
        %v555 = vunpack.c.l.b16 %v484
        %v556 = vunpack.c.l.b16 %v485
        %v557 = vunpack.c.l.b16 %v486
        %v558 = vunpack.c.l.b16 %v487
        %v559 = vunpack.c.l.b16 %v488
        %v560 = vunpack.c.l.b16 %v489
        %v561 = vunpack.c.l.b16 %v490
        %v562 = vunpack.c.l.b16 %v491
        %v563 = vunpack.c.l.b16 %v492
        %v564 = vunpack.c.l.b16 %v493
        %v565 = vunpack.c.l.b16 %v494
        %v566 = vunpack.c.l.b16 %v495
        %v567 = vunpack.c.l.b16 %v496
        %v568 = vunpack.c.l.b16 %v497
        %v569 = vunpack.c.l.b16 %v498
        %v570 = vunpack.c.l.b16 %v499
        %v571 = vunpack.c.l.b16 %v500
        %v572 = vunpack.c.l.b16 %v501
        %v573 = vunpack.c.l.b16 %v502
        %v574 = vunpack.c.l.b16 %v503
        %v575 = vunpack.c.l.b16 %v504
        %v576 = vunpack.c.l.b16 %v505
        %v577 = vunpack.c.l.b16 %v506
        %v578 = vunpack.c.l.b16 %v507
        %v579 = vpack.c.b16 %v548, %v547
        %v580 = vpack.c.b16 %v550, %v549
        %v581 = vpack.c.b16 %v552, %v551
        %v582 = vpack.c.b16 %v554, %v553
        %v583 = vpack.c.b16 %v556, %v555
        %v584 = vpack.c.b16 %v558, %v557
        %v585 = vpack.c.b16 %v560, %v559
        %v586 = vpack.c.b16 %v562, %v561
        %v587 = vpack.c.b16 %v564, %v563
        %v588 = vpack.c.b16 %v566, %v565
        %v589 = vpack.c.b16 %v568, %v567
        %v590 = vpack.c.b16 %v570, %v569
        %v591 = vpack.c.b16 %v572, %v571
        %v592 = vpack.c.b16 %v574, %v573
        %v593 = vpack.c.b16 %v576, %v575
        %v594 = vpack.c.b16 %v578, %v577
        %611 = vmatprep.subr.bf16.mxu0 0
        %612 = vmatpush1.bf16.msra.mxu0 %v579
        %613 = vmatprep.subr.bf16.mxu0 0
        %614 = vmatpush1.bf16.msra.mxu0 %v580
        %615 = vmatprep.subr.bf16.mxu0 0
        %616 = vmatpush1.bf16.msra.mxu0 %v581
        %617 = vmatprep.subr.bf16.mxu0 0
        %618 = vmatpush1.bf16.msra.mxu0 %v582
        %619 = vmatprep.subr.bf16.mxu0 0
        %620 = vmatpush1.bf16.msra.mxu0 %v583
        %621 = vmatprep.subr.bf16.mxu0 0
        %622 = vmatpush1.bf16.msra.mxu0 %v584
        %623 = vmatprep.subr.bf16.mxu0 0
        %624 = vmatpush1.bf16.msra.mxu0 %v585
        %625 = vmatprep.subr.bf16.mxu0 0
        %626 = vmatpush1.bf16.msra.mxu0 %v586
        %627 = vmatprep.subr.bf16.mxu0 0
        %628 = vmatpush1.bf16.msra.mxu0 %v587
        %629 = vmatprep.subr.bf16.mxu0 0
        %630 = vmatpush1.bf16.msra.mxu0 %v588
        %631 = vmatprep.subr.bf16.mxu0 0
        %632 = vmatpush1.bf16.msra.mxu0 %v589
        %633 = vmatprep.subr.bf16.mxu0 0
        %634 = vmatpush1.bf16.msra.mxu0 %v590
        %635 = vmatprep.subr.bf16.mxu0 0
        %636 = vmatpush1.bf16.msra.mxu0 %v591
        %637 = vmatprep.subr.bf16.mxu0 0
        %638 = vmatpush1.bf16.msra.mxu0 %v592
        %639 = vmatprep.subr.bf16.mxu0 0
        %640 = vmatpush1.bf16.msra.mxu0 %v593
        %641 = vmatprep.subr.bf16.mxu0 0
        %642 = vmatpush1.bf16.msra.mxu0 %v594
        %643 = vmatprep.mubr.bf16.mxu0 %v468
        %644 = vmatmul.mubr.bf16.gmra.mrb[0].mxu0 %v299
        %v645 = vpop.f32.mrb[0].mxu0
        %v646 = vadd.f32 %v513, %v645
        %v647 = vpop.f32.mrb[0].mxu0
        %v648 = vpop.f32.mrb[0].mxu0
        %v649 = vadd.f32 %v513, %v648
        %v650 = vpop.f32.mrb[0].mxu0
        %651 = vmatprep.mubr.bf16.mxu0 %v469
        %652 = vmatmul.mubr.bf16.gmra.mrb[0].mxu0 %v300
        %v653 = vpop.f32.mrb[0].mxu0
        %v654 = vadd.f32 %v513, %v653
        %v655 = vpop.f32.mrb[0].mxu0
        %v656 = vpop.f32.mrb[0].mxu0
        %v657 = vadd.f32 %v513, %v656
        %v658 = vpop.f32.mrb[0].mxu0
        %659 = vmatprep.mubr.bf16.mxu0 %v470
        %660 = vmatmul.mubr.bf16.gmra.mrb[0].mxu0 %v301
        %v661 = vpop.f32.mrb[0].mxu0
        %v662 = vadd.f32 %v513, %v661
        %v663 = vpop.f32.mrb[0].mxu0
        %v664 = vpop.f32.mrb[0].mxu0
        %v665 = vadd.f32 %v513, %v664
        %v666 = vpop.f32.mrb[0].mxu0
        %667 = vmatprep.mubr.bf16.mxu0 %v471
        %668 = vmatmul.mubr.bf16.gmra.mrb[0].mxu0 %v302
        %v669 = vpop.f32.mrb[0].mxu0
        %v670 = vadd.f32 %v513, %v669
        %v671 = vpop.f32.mrb[0].mxu0
        %v672 = vpop.f32.mrb[0].mxu0
        %v673 = vadd.f32 %v513, %v672
        %v674 = vpop.f32.mrb[0].mxu0
        %675 = vmatprep.mubr.bf16.mxu0 %v472
        %676 = vmatmul.mubr.bf16.gmra.mrb[0].mxu0 %v303
        %v677 = vpop.f32.mrb[0].mxu0
        %v678 = vadd.f32 %v513, %v677
        %v679 = vpop.f32.mrb[0].mxu0
        %v680 = vpop.f32.mrb[0].mxu0
        %v681 = vadd.f32 %v513, %v680
        %v682 = vpop.f32.mrb[0].mxu0
        %683 = vmatprep.mubr.bf16.mxu0 %v473
        %684 = vmatmul.mubr.bf16.gmra.mrb[0].mxu0 %v304
        %v685 = vpop.f32.mrb[0].mxu0
        %v686 = vadd.f32 %v513, %v685
        %v687 = vpop.f32.mrb[0].mxu0
        %v688 = vpop.f32.mrb[0].mxu0
        %v689 = vadd.f32 %v513, %v688
        %v690 = vpop.f32.mrb[0].mxu0
        %691 = vmatprep.mubr.bf16.mxu0 %v474
        %692 = vmatmul.mubr.bf16.gmra.mrb[0].mxu0 %v305
        %v693 = vpop.f32.mrb[0].mxu0
        %v694 = vadd.f32 %v513, %v693
        %v695 = vpop.f32.mrb[0].mxu0
        %v696 = vpop.f32.mrb[0].mxu0
        %v697 = vadd.f32 %v513, %v696
        %v698 = vpop.f32.mrb[0].mxu0
        %699 = vmatprep.mubr.bf16.mxu0 %v475
        %700 = vmatmul.mubr.bf16.gmra.mrb[0].mxu0 %v306
        %v701 = vpop.f32.mrb[0].mxu0
        %v702 = vadd.f32 %v513, %v701
        %v703 = vpop.f32.mrb[0].mxu0
        %v704 = vpop.f32.mrb[0].mxu0
        %v705 = vadd.f32 %v513, %v704
        %v706 = vpop.f32.mrb[0].mxu0
        %707 = vdwg.mxu0
        %v708 = vmax.f32 %v646, 0.0
        %v709 = vmax.f32 %v649, 0.0
        %v710 = vmax.f32 %v654, 0.0
        %v711 = vmax.f32 %v657, 0.0
        %v712 = vmax.f32 %v662, 0.0
        %v713 = vmax.f32 %v665, 0.0
        %v714 = vmax.f32 %v670, 0.0
        %v715 = vmax.f32 %v673, 0.0
        %v716 = vmax.f32 %v678, 0.0
        %v717 = vmax.f32 %v681, 0.0
        %v718 = vmax.f32 %v686, 0.0
        %v719 = vmax.f32 %v689, 0.0
        %v720 = vmax.f32 %v694, 0.0
        %v721 = vmax.f32 %v697, 0.0
        %v722 = vmax.f32 %v702, 0.0
        %v723 = vmax.f32 %v705, 0.0
        %s724 = scalar_select %p246, 1, 0
        %v725 = vstv %s724
        %vm726 = vcmp.eq.s32.totalorder %v725, 1
        %v727 = vsel %vm726, %v646, %v708
        %v728 = vsel %vm726, %v649, %v709
        %v729 = vsel %vm726, %v654, %v710
        %v730 = vsel %vm726, %v657, %v711
        %v731 = vsel %vm726, %v662, %v712
        %v732 = vsel %vm726, %v665, %v713
        %v733 = vsel %vm726, %v670, %v714
        %v734 = vsel %vm726, %v673, %v715
        %v735 = vsel %vm726, %v678, %v716
        %v736 = vsel %vm726, %v681, %v717
        %v737 = vsel %vm726, %v686, %v718
        %v738 = vsel %vm726, %v689, %v719
        %v739 = vsel %vm726, %v694, %v720
        %v740 = vsel %vm726, %v697, %v721
        %v741 = vsel %vm726, %v702, %v722
        %v742 = vsel %vm726, %v705, %v723
        %743 = vst [vmem:[#allocation2] sm:$0xff] %v727
        %744 = vst [vmem:[#allocation2 + $0x8] sm:$0xff] %v728
        %745 = vst [vmem:[#allocation2 + $0x10] sm:$0xff] %v729
        %746 = vst [vmem:[#allocation2 + $0x18] sm:$0xff] %v730
        %747 = vst [vmem:[#allocation2 + $0x20] sm:$0xff] %v731
        %748 = vst [vmem:[#allocation2 + $0x28] sm:$0xff] %v732
        %749 = vst [vmem:[#allocation2 + $0x30] sm:$0xff] %v733
        %750 = vst [vmem:[#allocation2 + $0x38] sm:$0xff] %v734
        %751 = vst [vmem:[#allocation2 + $0x40] sm:$0xff] %v735
        %752 = vst [vmem:[#allocation2 + $0x48] sm:$0xff] %v736
        %753 = vst [vmem:[#allocation2 + $0x50] sm:$0xff] %v737
        %754 = vst [vmem:[#allocation2 + $0x58] sm:$0xff] %v738
        %755 = vst [vmem:[#allocation2 + $0x60] sm:$0xff] %v739
        %756 = vst [vmem:[#allocation2 + $0x68] sm:$0xff] %v740
        %757 = vst [vmem:[#allocation2 + $0x70] sm:$0xff] %v741
        %758 = vst [vmem:[#allocation2 + $0x78] sm:$0xff] %v742
        %759 = vst [vmem:[#allocation9] sm:$0xff] %v727
        %760 = vst [vmem:[#allocation9 + $0x8] sm:$0xff] %v728
        %761 = vst [vmem:[#allocation9 + $0x10] sm:$0xff] %v729
        %762 = vst [vmem:[#allocation9 + $0x18] sm:$0xff] %v730
        %763 = vst [vmem:[#allocation9 + $0x20] sm:$0xff] %v731
        %764 = vst [vmem:[#allocation9 + $0x28] sm:$0xff] %v732
        %765 = vst [vmem:[#allocation9 + $0x30] sm:$0xff] %v733
        %766 = vst [vmem:[#allocation9 + $0x38] sm:$0xff] %v734
        %767 = vst [vmem:[#allocation9 + $0x40] sm:$0xff] %v735
        %768 = vst [vmem:[#allocation9 + $0x48] sm:$0xff] %v736
        %769 = vst [vmem:[#allocation9 + $0x50] sm:$0xff] %v737
        %770 = vst [vmem:[#allocation9 + $0x58] sm:$0xff] %v738
        %771 = vst [vmem:[#allocation9 + $0x60] sm:$0xff] %v739
        %772 = vst [vmem:[#allocation9 + $0x68] sm:$0xff] %v740
        %773 = vst [vmem:[#allocation9 + $0x70] sm:$0xff] %v741
        %774 = vst [vmem:[#allocation9 + $0x78] sm:$0xff] %v742
        // Predicated region
        $region53: #{tpu_custom_call.1} parent=35 // pred_check
          %p775 = pneg %p125
        $region54: #{tpu_custom_call.1} parent=35 // pred_check_branch
          %777 = sbr.rel (%p775) target = $region56
        $region55: #{tpu_custom_call.1} parent=35 // pred_region
          %s779 = ssub.s32 2048, 2048
          %780 = vsyncadd [#allocation5], %s779
          %s781 = sshll.u32 [#allocation9], 4
          %s782 = int_to_ptr.vmem [resolvable:$true] %s781
          %787 = dma.vmem_to_hbm [thread:$0]  %s782, 2048, %s4, [#allocation5], 128, 128, 8
        $region56: #{tpu_custom_call.1} parent=35 // pred_fallthru
          _
        // Predicated region
        $region57: #{tpu_custom_call.1} parent=35 // pred_check
          %p788 = pneg %p125
        $region58: #{tpu_custom_call.1} parent=35 // pred_check_branch
          %790 = sbr.rel (%p788) target = $region60
        $region59: #{tpu_custom_call.1} parent=35 // pred_region
          %791 = dma.done [#allocation5], 2048
        $region60: #{tpu_custom_call.1} parent=35 // pred_fallthru
          _
      $region36: #{tpu_custom_call.1} parent=5 // pred_fallthru
        _
      %p792 = scmp.le.s32.totalorder 2, %s13
      // Predicated region
      $region61: #{tpu_custom_call.1} parent=5 // pred_check
        %p793 = pneg %p792
      $region62: #{tpu_custom_call.1} parent=5 // pred_check_branch
        %795 = sbr.rel (%p793) target = $region64
      $region63: #{tpu_custom_call.1} parent=5 // pred_region
        %s796 = ssub.s32 %s13, 2
      $region64: #{tpu_custom_call.1} parent=5 // pred_fallthru
        _
    $region6: #{tpu_custom_call.1} parent=1 // loop_footer
      %s17 = sadd.s32 1, %s13
    $region7: #{tpu_custom_call.1} parent=1 // loop_footer_branch
      %12 = sbr.rel target = $region3
    $region8: #{tpu_custom_call.1} parent=1 // loop_exit
      _
    %797 = vsyncpa [#allocation4], 1
    %s798 = scalar_lea.sflag [#allocation4], 1
    %799 = vsyncpa %s798, 1
    %800 = vsyncpa [#allocation7], 1
    %801 = vsyncpa [#allocation5], 1
    %s802 = scalar_lea.sflag [#allocation5], 1
    %803 = vsyncpa %s802, 1

</llo_original>
